<compile_context>
chip_gen: v5e
topology: v5e:2x2
jax: 0.10.0
libtpu: 0.0.40
codegen_flags: <defaults>
</compile_context>

<pallas_src>
import jax
import jax.numpy as jnp
from jax.experimental import pallas as pl
from jax.experimental.pallas import tpu as pltpu

IN_FEATURES = 10
OUT_FEATURES = 2


def _round_up(n, m):
    return ((n + m - 1) // m) * m


def linear_kernel(x_ref, w_ref, b_ref, o_ref):
    # x_ref: [TB, 10], w_ref: [10, 2], b_ref: [1, 2], o_ref: [TB, 2]
    y = jnp.dot(x_ref[...], w_ref[...], preferred_element_type=jnp.float32)
    o_ref[...] = (y + b_ref[...].astype(jnp.float32)).astype(o_ref.dtype)


def simple_model_forward(x, w_t, b, *, tb=8192):
    """y = x @ w_t + b  (equivalent to torch.nn.Linear(10, 2)(x)).

    x:   [B, 10] float32
    w_t: [10, 2] float32   (PyTorch weight transposed)
    b:   [2]     float32
    """
    B = x.shape[0]
    dtype = x.dtype

    # Batch tile: multiple of 8, capped at `tb` and at the (rounded-up) batch.
    B8 = _round_up(B, 8)
    TB = min(_round_up(tb, 8), B8)
    # Keep at least 2 grid steps when the batch allows it, so the "parallel"
    # batch axis can shard across v7x's 2 TensorCores (neutral on v5e/v6e).
    if B8 >= 16:
        TB = min(TB, _round_up(-(-B8 // 2), 8))

    b2d = b.reshape(1, OUT_FEATURES).astype(dtype)

    grid = (pl.cdiv(B, TB),)
    y = pl.pallas_call(
        linear_kernel,
        out_shape=jax.ShapeDtypeStruct((B, OUT_FEATURES), dtype),
        grid_spec=pl.GridSpec(
            grid=grid,
            in_specs=[
                # Last dim equals the full array dim -> legal, no padding needed.
                pl.BlockSpec((TB, IN_FEATURES), lambda i: (i, 0)),
                # Constant block index -> weight stays resident across tiles.
                pl.BlockSpec((IN_FEATURES, OUT_FEATURES), lambda i: (0, 0)),
                # Tiny resident bias row.
                pl.BlockSpec((1, OUT_FEATURES), lambda i: (0, 0)),
            ],
            # Narrow, contiguous output block (full last dim -> legal). Ragged
            # last batch tile is masked by Pallas on writeback.
            out_specs=pl.BlockSpec((TB, OUT_FEATURES), lambda i: (i, 0)),
        ),
        compiler_params=pltpu.CompilerParams(
            dimension_semantics=("parallel",),
        ),
    )(x, w_t, b2d)

    return y


if __name__ == "__main__":
    key = jax.random.PRNGKey(0)
    kx, kw, kb = jax.random.split(key, 3)

    batch = 8
    # PyTorch stores weight as [out, in]; we keep its transpose [in, out].
    w_torch_layout = jax.random.normal(kw, (OUT_FEATURES, IN_FEATURES), jnp.float32) * 0.1
    w_t = jnp.transpose(w_torch_layout)                       # [10, 2]
    b = jax.random.normal(kb, (OUT_FEATURES,), jnp.float32) * 0.1

    x = jax.random.normal(kx, (batch, IN_FEATURES), jnp.float32)

    y = simple_model_forward(x, w_t, b)
    jax.block_until_ready(y)

    # Correctness check against plain-JAX reference of nn.Linear semantics.
    y_ref = x @ w_t + b[None, :]
    assert y.shape == (batch, OUT_FEATURES)
    assert jnp.allclose(y, y_ref, atol=1e-5, rtol=1e-5)

    # Larger batch with a ragged last tile (2000 % 512 != 0) to exercise the
    # multi-step grid path and Pallas boundary-block masking.
    big_batch = 2000
    xb = jax.random.normal(kx, (big_batch, IN_FEATURES), jnp.float32)
    yb = simple_model_forward(xb, w_t, b, tb=512)
    jax.block_until_ready(yb)
    yb_ref = xb @ w_t + b[None, :]
    assert yb.shape == (big_batch, OUT_FEATURES)
    assert jnp.allclose(yb, yb_ref, atol=1e-4, rtol=1e-4)

    print("KERNEL_OK")
</pallas_src>

<mosaic_0001>
module attributes {stable_mosaic.version = 11 : i64} {
  func.func @linear_kernel(%arg0: i32, %arg1: memref<8x10xf32, #tpu.memory_space<vmem>>, %arg2: memref<10x2xf32, #tpu.memory_space<vmem>>, %arg3: memref<1x2xf32, #tpu.memory_space<vmem>>, %arg4: memref<8x2xf32, #tpu.memory_space<vmem>>) attributes {dimension_semantics = [#tpu.dimension_semantics<parallel>], iteration_bounds = array<i64: 1>, scalar_prefetch = 0 : i64, scratch_operands = 0 : i64, tpu.core_type = #tpu.core_type<tc>, window_params = [{transform_indices = @transform_0, window_bounds = array<i64: 8, 10>}, {pipeline_mode = #tpu.pipeline_mode<synchronous>, transform_indices = @transform_1, window_bounds = array<i64: 10, 2>}, {pipeline_mode = #tpu.pipeline_mode<synchronous>, transform_indices = @transform_2, window_bounds = array<i64: 1, 2>}, {transform_indices = @transform_3, window_bounds = array<i64: 8, 2>}]} {
    %c0 = arith.constant 0 : index
    %c0_0 = arith.constant 0 : index
    %0 = vector.load %arg1[%c0, %c0_0] : memref<8x10xf32, #tpu.memory_space<vmem>>, vector<8x10xf32>
    %c0_1 = arith.constant 0 : index
    %c0_2 = arith.constant 0 : index
    %1 = vector.load %arg2[%c0_1, %c0_2] : memref<10x2xf32, #tpu.memory_space<vmem>>, vector<10x2xf32>
    %cst = arith.constant dense<0.000000e+00> : vector<8x2xf32>
    %2 = tpu.matmul %0, %1, %cst {dimension_numbers = #tpu.dot_dimension_numbers<[1], [0], [0], [1], [0, 0, 1, 1], [], []>} : vector<8x10xf32>, vector<10x2xf32>, vector<8x2xf32> -> vector<8x2xf32>
    %c0_3 = arith.constant 0 : index
    %c0_4 = arith.constant 0 : index
    %3 = vector.load %arg3[%c0_3, %c0_4] : memref<1x2xf32, #tpu.memory_space<vmem>>, vector<1x2xf32>
    %4 = vector.broadcast %3 : vector<1x2xf32> to vector<8x2xf32>
    %5 = arith.addf %2, %4 : vector<8x2xf32>
    %c0_5 = arith.constant 0 : index
    %c0_6 = arith.constant 0 : index
    %6 = vector.load %arg4[%c0_5, %c0_6] : memref<8x2xf32, #tpu.memory_space<vmem>>, vector<8x2xf32>
    tpu.vector_store %arg4[%c0_5, %c0_6], %5 {strides = array<i32>} : memref<8x2xf32, #tpu.memory_space<vmem>>, vector<8x2xf32>,
    return
  }
  func.func @transform_0(%arg0: i32) -> (i32, i32) {
    %c0_i32 = arith.constant 0 : i32
    %c0_i32_0 = arith.constant 0 : i32
    return %arg0, %c0_i32 : i32, i32
  }
  func.func @transform_1(%arg0: i32) -> (i32, i32) {
    %c0_i32 = arith.constant 0 : i32
    %c0_i32_0 = arith.constant 0 : i32
    %c0_i32_1 = arith.constant 0 : i32
    return %c0_i32, %c0_i32_0 : i32, i32
  }
  func.func @transform_2(%arg0: i32) -> (i32, i32) {
    %c0_i32 = arith.constant 0 : i32
    %c0_i32_0 = arith.constant 0 : i32
    %c0_i32_1 = arith.constant 0 : i32
    return %c0_i32, %c0_i32_0 : i32, i32
  }
  func.func @transform_3(%arg0: i32) -> (i32, i32) {
    %c0_i32 = arith.constant 0 : i32
    %c0_i32_0 = arith.constant 0 : i32
    return %arg0, %c0_i32 : i32, i32
  }
}

</mosaic_0001>

<llo_original>
// kernel: tpu_custom_call.1
$region0: #{tpu_custom_call.1}
  #allocation0 [shape = 'u32[]', space=smem, size = 0x4, offset = 0x4, fixed_abs, tag = 'smem constant byte address 0x4 - core index']
  #allocation1 [shape = 'u32[72,128]{1,0:T(1,128)}', space=vmem, size = 0x9000, scoped, tag = 'internal scratch']
  %s0 = inlined_call_operand.vmem [shape: f32[8,10], index: 0, kind: input, shape index: {}]
  %s1 = inlined_call_operand.vmem [shape: f32[10,2], index: 1, kind: input, shape index: {}]
  %s2 = inlined_call_operand.vmem [shape: f32[1,2], index: 2, kind: input, shape index: {}]
  %s3 = inlined_call_operand.vmem [shape: f32[8,2], index: 3, kind: output, shape index: {}]
  %s4 = sld [smem:[#allocation0]]
  $region22: #{tpu_custom_call.1} parent=0
    _
  %s6 = ssub.s32 1, %s4
  %s7 = scalar_select 0, %s6, %s4
  // Predicated region
  $region2: #{tpu_custom_call.1} parent=0 // pred_check
    _
  $region3: #{tpu_custom_call.1} parent=0 // pred_check_branch
    %9 = sbr.rel (0) target = $region5
  $region4: #{tpu_custom_call.1} parent=0 // pred_region
    _
  $region5: #{tpu_custom_call.1} parent=0 // pred_fallthru
    _
  // Predicated region
  $region6: #{tpu_custom_call.1} parent=0 // pred_check
    _
  $region7: #{tpu_custom_call.1} parent=0 // pred_check_branch
    %11 = sbr.rel (0) target = $region9
  $region8: #{tpu_custom_call.1} parent=0 // pred_region
    _
  $region9: #{tpu_custom_call.1} parent=0 // pred_fallthru
    _
  // Predicated region
  $region10: #{tpu_custom_call.1} parent=0 // pred_check
    _
  $region11: #{tpu_custom_call.1} parent=0 // pred_check_branch
    %13 = sbr.rel (0) target = $region13
  $region12: #{tpu_custom_call.1} parent=0 // pred_region
    _
  $region13: #{tpu_custom_call.1} parent=0 // pred_fallthru
    _
  %v14 = vld [vmem:[%s0] sm:$0xff]
  %v15 = vld [vmem:[%s1] sm:$0xff]
  %v16 = vld [vmem:[%s1 + $0x8] sm:$0x3]
  %v17 = vld [vmem:[%s2] sm:$0x1]
  %v19 = vperm.slane %v17, 0
  %vm21 = vcmask 80896
  %v23 = vsel %vm21, %v14, 0
  %vm25 = vcmask 1041408
  %v27 = vsel %vm25, %v16, 0
  %29 = vmatpush.msra.mxu0 0.0
  %30 = vmatpush.msra.mxu0 0.0
  %31 = vmatpush.msra.mxu0 0.0
  %32 = vmatpush.msra.mxu0 0.0
  %33 = vmatpush.msra.mxu0 0.0
  %34 = vmatpush.msra.mxu0 0.0
  %35 = vmatpush.msra.mxu0 0.0
  %36 = vmatpush.msra.mxu0 0.0
  %37 = vmatpush.msra.mxu0 0.0
  %38 = vmatpush.msra.mxu0 0.0
  %39 = vmatpush.msra.mxu0 0.0
  %40 = vmatpush.msra.mxu0 0.0
  %41 = vmatpush.msra.mxu0 0.0
  %42 = vmatpush.msra.mxu0 0.0
  %43 = vmatpush.msra.mxu0 %v27
  %44 = vmatpush.msra.mxu0 %v15
  %45 = vmatmul.f32.gmra.mxu0 %v23
  %v46 = vpop.f32.mrf.mxu0
  %v47 = vadd.f32 %v19, %v46
  %48 = vdwg.mxu0
  %vm49 = vcmask 15360
  %50 = vst.msk [vmem:[%s3] sm:$0xff] %vm49, %v47
  // Predicated region
  $region14: #{tpu_custom_call.1} parent=0 // pred_check
    _
  $region15: #{tpu_custom_call.1} parent=0 // pred_check_branch
    %52 = sbr.rel (0) target = $region17
  $region16: #{tpu_custom_call.1} parent=0 // pred_region
    _
  $region17: #{tpu_custom_call.1} parent=0 // pred_fallthru
    _
  // Predicated region
  $region18: #{tpu_custom_call.1} parent=0 // pred_check
    _
  $region19: #{tpu_custom_call.1} parent=0 // pred_check_branch
    %54 = sbr.rel (0) target = $region21
  $region20: #{tpu_custom_call.1} parent=0 // pred_region
    _
  $region21: #{tpu_custom_call.1} parent=0 // pred_fallthru
    _

</llo_original>
